<compile_context>
chip_gen: v5e
topology: v5e:2x2
jax: 0.10.0
libtpu: 0.0.40
codegen_flags: <defaults>
</compile_context>

<pallas_src>
import jax
import jax.numpy as jnp
from jax.experimental import pallas as pl
from jax.experimental.pallas import tpu as pltpu

# real / lane-padded feature dims
D_IN, D_H1, D_H2, D_OUT = 91, 182, 364, 1
P_H1, P_H2, P_OUT = 256, 384, 128     # D_IN stays 91 (no input padding pass)

MAX_TILE_B = 4096


def _round_up(x, m):
    return (x + m - 1) // m * m


def _pick_tile_b(batch):
    # >=2 grid steps once the batch exceeds one tile (v7x megacore uses both
    # TensorCores); tiles are multiples of 128 for packed bf16 vregs and
    # large, clean DMAs; capped at 4096 rows for VMEM headroom.
    t = _round_up(max(pl.cdiv(batch, 2), 1), 128)
    return min(MAX_TILE_B, t)


def mlp_kernel(x_ref, w1_ref, b1_ref, w2_ref, b2_ref, w3_ref, b3_ref, o_ref):
    # x arrives as raw f32 rows (TILE_B, 91); cast to bf16 in-register.
    x = x_ref[...].astype(jnp.bfloat16)                                 # (TB, 91)
    h1 = jnp.dot(x, w1_ref[...], preferred_element_type=jnp.float32) + b1_ref[...]
    h1 = jnp.maximum(h1, 0.0).astype(jnp.bfloat16)                      # (TB, 256)
    h2 = jnp.dot(h1, w2_ref[...], preferred_element_type=jnp.float32) + b2_ref[...]
    h2 = jnp.maximum(h2, 0.0).astype(jnp.bfloat16)                      # (TB, 384)
    o = jnp.dot(h2, w3_ref[...], preferred_element_type=jnp.float32) + b3_ref[...]
    o_ref[...] = o.astype(jnp.bfloat16)                                 # (TB, 128) bf16; col 0 real


def pad_params(params):
    """Zero-pad weight output dims to lane multiples (bf16); biases stay f32.
    Layer-1 input dim stays at 91 so x needs no host-side padding."""
    w1, b1, w2, b2, w3, b3 = params

    def pw(w, pi, po):
        wp = jnp.zeros((pi, po), jnp.float32).at[: w.shape[0], : w.shape[1]].set(w)
        return wp.astype(jnp.bfloat16)

    def pb(b, po):
        return jnp.zeros((1, po), jnp.float32).at[:, : b.shape[1]].set(b)

    return (
        pw(w1, D_IN, P_H1),    # (91, 256)
        pb(b1, P_H1),
        pw(w2, P_H1, P_H2),    # (256, 384)
        pb(b2, P_H2),
        pw(w3, P_H2, P_OUT),   # (384, 128) -- only column 0 is real
        pb(b3, P_OUT),
    )


@jax.jit
def net_forward(x, padded_params):
    w1, b1, w2, b2, w3, b3 = padded_params
    B = x.shape[0]
    tile_b = _pick_tile_b(B)
    b_pad = _round_up(B, tile_b)
    if b_pad != B:
        # rows-only padding (usually a no-op for nice batch sizes); no feature
        # padding or dtype-cast slab is ever materialized in HBM.
        x = jnp.pad(x, ((0, b_pad - B), (0, 0)))

    resident = lambda i: (0, 0)   # weights/biases: same block for every tile
    out = pl.pallas_call(
        mlp_kernel,
        out_shape=jax.ShapeDtypeStruct((b_pad, P_OUT), jnp.bfloat16),
        grid=(b_pad // tile_b,),
        in_specs=[
            pl.BlockSpec((tile_b, D_IN), lambda i: (i, 0)),   # raw f32 rows, K=91
            pl.BlockSpec((D_IN, P_H1), resident),
            pl.BlockSpec((1, P_H1), resident),
            pl.BlockSpec((P_H1, P_H2), resident),
            pl.BlockSpec((1, P_H2), resident),
            pl.BlockSpec((P_H2, P_OUT), resident),
            pl.BlockSpec((1, P_OUT), resident),
        ],
        out_specs=pl.BlockSpec((tile_b, P_OUT), lambda i: (i, 0)),
        compiler_params=pltpu.CompilerParams(
            dimension_semantics=("parallel",),
            vmem_limit_bytes=48 * 1024 * 1024,
        ),
    )(x, w1, b1, w2, b2, w3, b3)

    # Strip batch padding, keep the single real output column, return f32.
    return out[:B, :D_OUT].astype(jnp.float32)


def init_params(key):
    """PyTorch nn.Linear default init: U(-1/sqrt(fan_in), 1/sqrt(fan_in)).
    Weights stored transposed as (in, out)."""
    dims = [(D_IN, D_H1), (D_H1, D_H2), (D_H2, D_OUT)]
    params = []
    keys = jax.random.split(key, 2 * len(dims))
    for i, (fan_in, fan_out) in enumerate(dims):
        bound = 1.0 / (fan_in ** 0.5)
        w = jax.random.uniform(keys[2 * i], (fan_in, fan_out), jnp.float32, -bound, bound)
        b = jax.random.uniform(keys[2 * i + 1], (1, fan_out), jnp.float32, -bound, bound)
        params.extend([w, b])
    return tuple(params)


def reference_forward(x, params):
    w1, b1, w2, b2, w3, b3 = params
    h1 = jnp.maximum(x @ w1 + b1, 0.0)
    h2 = jnp.maximum(h1 @ w2 + b2, 0.0)
    return h2 @ w3 + b3


if __name__ == "__main__":
    key = jax.random.PRNGKey(0)
    pkey, xkey = jax.random.split(key)
    params = init_params(pkey)
    padded = pad_params(params)

    B = 8
    x = jax.random.normal(xkey, (B, D_IN), jnp.float32)

    out = net_forward(x, padded)
    out = jax.block_until_ready(out)

    ref = reference_forward(x, params)
    assert out.shape == (B, 1), out.shape
    # bf16 weights/activations/output with f32 accumulation -> loose tolerance.
    assert jnp.allclose(out, ref, atol=5e-2, rtol=5e-2), "mismatch vs reference"

    print("KERNEL_OK")
</pallas_src>

<mosaic_0001>
module attributes {stable_mosaic.version = 11 : i64} {
  func.func @mlp_kernel(%arg0: i32, %arg1: memref<128x91xf32, #tpu.memory_space<vmem>>, %arg2: memref<91x256xbf16, #tpu.memory_space<vmem>>, %arg3: memref<1x256xf32, #tpu.memory_space<vmem>>, %arg4: memref<256x384xbf16, #tpu.memory_space<vmem>>, %arg5: memref<1x384xf32, #tpu.memory_space<vmem>>, %arg6: memref<384x128xbf16, #tpu.memory_space<vmem>>, %arg7: memref<1x128xf32, #tpu.memory_space<vmem>>, %arg8: memref<128x128xbf16, #tpu.memory_space<vmem>>) attributes {dimension_semantics = [#tpu.dimension_semantics<parallel>], iteration_bounds = array<i64: 1>, scalar_prefetch = 0 : i64, scratch_operands = 0 : i64, tpu.core_type = #tpu.core_type<tc>, window_params = [{transform_indices = @transform_0, window_bounds = array<i64: 128, 91>}, {pipeline_mode = #tpu.pipeline_mode<synchronous>, transform_indices = @transform_1, window_bounds = array<i64: 91, 256>}, {pipeline_mode = #tpu.pipeline_mode<synchronous>, transform_indices = @transform_2, window_bounds = array<i64: 1, 256>}, {pipeline_mode = #tpu.pipeline_mode<synchronous>, transform_indices = @transform_3, window_bounds = array<i64: 256, 384>}, {pipeline_mode = #tpu.pipeline_mode<synchronous>, transform_indices = @transform_4, window_bounds = array<i64: 1, 384>}, {pipeline_mode = #tpu.pipeline_mode<synchronous>, transform_indices = @transform_5, window_bounds = array<i64: 384, 128>}, {pipeline_mode = #tpu.pipeline_mode<synchronous>, transform_indices = @transform_6, window_bounds = array<i64: 1, 128>}, {transform_indices = @transform_7, window_bounds = array<i64: 128, 128>}]} {
    %c0 = arith.constant 0 : index
    %c0_0 = arith.constant 0 : index
    %0 = vector.load %arg1[%c0, %c0_0] : memref<128x91xf32, #tpu.memory_space<vmem>>, vector<128x91xf32>
    %1 = arith.truncf %0 : vector<128x91xf32> to vector<128x91xbf16>
    %c0_1 = arith.constant 0 : index
    %c0_2 = arith.constant 0 : index
    %2 = vector.load %arg2[%c0_1, %c0_2] : memref<91x256xbf16, #tpu.memory_space<vmem>>, vector<91x256xbf16>
    %cst = arith.constant dense<0.000000e+00> : vector<128x256xf32>
    %3 = tpu.matmul %1, %2, %cst {dimension_numbers = #tpu.dot_dimension_numbers<[1], [0], [0], [1], [0, 0, 1, 1], [], []>} : vector<128x91xbf16>, vector<91x256xbf16>, vector<128x256xf32> -> vector<128x256xf32>
    %c0_3 = arith.constant 0 : index
    %c0_4 = arith.constant 0 : index
    %4 = vector.load %arg3[%c0_3, %c0_4] : memref<1x256xf32, #tpu.memory_space<vmem>>, vector<1x256xf32>
    %5 = vector.broadcast %4 : vector<1x256xf32> to vector<128x256xf32>
    %6 = arith.addf %3, %5 : vector<128x256xf32>
    %cst_5 = arith.constant 0.000000e+00 : f32
    %7 = vector.broadcast %cst_5 : f32 to vector<128x256xf32>
    %8 = arith.maximumf %6, %7 : vector<128x256xf32>
    %9 = arith.truncf %8 : vector<128x256xf32> to vector<128x256xbf16>
    %c0_6 = arith.constant 0 : index
    %c0_7 = arith.constant 0 : index
    %10 = vector.load %arg4[%c0_6, %c0_7] : memref<256x384xbf16, #tpu.memory_space<vmem>>, vector<256x384xbf16>
    %cst_8 = arith.constant dense<0.000000e+00> : vector<128x384xf32>
    %11 = tpu.matmul %9, %10, %cst_8 {dimension_numbers = #tpu.dot_dimension_numbers<[1], [0], [0], [1], [0, 0, 1, 1], [], []>} : vector<128x256xbf16>, vector<256x384xbf16>, vector<128x384xf32> -> vector<128x384xf32>
    %c0_9 = arith.constant 0 : index
    %c0_10 = arith.constant 0 : index
    %12 = vector.load %arg5[%c0_9, %c0_10] : memref<1x384xf32, #tpu.memory_space<vmem>>, vector<1x384xf32>
    %13 = vector.broadcast %12 : vector<1x384xf32> to vector<128x384xf32>
    %14 = arith.addf %11, %13 : vector<128x384xf32>
    %cst_11 = arith.constant 0.000000e+00 : f32
    %15 = vector.broadcast %cst_11 : f32 to vector<128x384xf32>
    %16 = arith.maximumf %14, %15 : vector<128x384xf32>
    %17 = arith.truncf %16 : vector<128x384xf32> to vector<128x384xbf16>
    %c0_12 = arith.constant 0 : index
    %c0_13 = arith.constant 0 : index
    %18 = vector.load %arg6[%c0_12, %c0_13] : memref<384x128xbf16, #tpu.memory_space<vmem>>, vector<384x128xbf16>
    %cst_14 = arith.constant dense<0.000000e+00> : vector<128x128xf32>
    %19 = tpu.matmul %17, %18, %cst_14 {dimension_numbers = #tpu.dot_dimension_numbers<[1], [0], [0], [1], [0, 0, 1, 1], [], []>} : vector<128x384xbf16>, vector<384x128xbf16>, vector<128x128xf32> -> vector<128x128xf32>
    %c0_15 = arith.constant 0 : index
    %c0_16 = arith.constant 0 : index
    %20 = vector.load %arg7[%c0_15, %c0_16] : memref<1x128xf32, #tpu.memory_space<vmem>>, vector<1x128xf32>
    %21 = vector.broadcast %20 : vector<1x128xf32> to vector<128x128xf32>
    %22 = arith.addf %19, %21 : vector<128x128xf32>
    %23 = arith.truncf %22 : vector<128x128xf32> to vector<128x128xbf16>
    %c0_17 = arith.constant 0 : index
    %c0_18 = arith.constant 0 : index
    %24 = vector.load %arg8[%c0_17, %c0_18] : memref<128x128xbf16, #tpu.memory_space<vmem>>, vector<128x128xbf16>
    tpu.vector_store %arg8[%c0_17, %c0_18], %23 {strides = array<i32>} : memref<128x128xbf16, #tpu.memory_space<vmem>>, vector<128x128xbf16>,
    return
  }
  func.func @transform_0(%arg0: i32) -> (i32, i32) {
    %c0_i32 = arith.constant 0 : i32
    %c0_i32_0 = arith.constant 0 : i32
    return %arg0, %c0_i32 : i32, i32
  }
  func.func @transform_1(%arg0: i32) -> (i32, i32) {
    %c0_i32 = arith.constant 0 : i32
    %c0_i32_0 = arith.constant 0 : i32
    %c0_i32_1 = arith.constant 0 : i32
    return %c0_i32, %c0_i32_0 : i32, i32
  }
  func.func @transform_2(%arg0: i32) -> (i32, i32) {
    %c0_i32 = arith.constant 0 : i32
    %c0_i32_0 = arith.constant 0 : i32
    %c0_i32_1 = arith.constant 0 : i32
    return %c0_i32, %c0_i32_0 : i32, i32
  }
  func.func @transform_3(%arg0: i32) -> (i32, i32) {
    %c0_i32 = arith.constant 0 : i32
    %c0_i32_0 = arith.constant 0 : i32
    %c0_i32_1 = arith.constant 0 : i32
    return %c0_i32, %c0_i32_0 : i32, i32
  }
  func.func @transform_4(%arg0: i32) -> (i32, i32) {
    %c0_i32 = arith.constant 0 : i32
    %c0_i32_0 = arith.constant 0 : i32
    %c0_i32_1 = arith.constant 0 : i32
    return %c0_i32, %c0_i32_0 : i32, i32
  }
  func.func @transform_5(%arg0: i32) -> (i32, i32) {
    %c0_i32 = arith.constant 0 : i32
    %c0_i32_0 = arith.constant 0 : i32
    %c0_i32_1 = arith.constant 0 : i32
    return %c0_i32, %c0_i32_0 : i32, i32
  }
  func.func @transform_6(%arg0: i32) -> (i32, i32) {
    %c0_i32 = arith.constant 0 : i32
    %c0_i32_0 = arith.constant 0 : i32
    %c0_i32_1 = arith.constant 0 : i32
    return %c0_i32, %c0_i32_0 : i32, i32
  }
  func.func @transform_7(%arg0: i32) -> (i32, i32) {
    %c0_i32 = arith.constant 0 : i32
    %c0_i32_0 = arith.constant 0 : i32
    return %arg0, %c0_i32 : i32, i32
  }
}

</mosaic_0001>

<llo_original>
// kernel: net_forward.1
$region0: #{net_forward.1}
  #allocation0 [shape = 'u32[]', space=smem, size = 0x4, offset = 0x4, fixed_abs, tag = 'smem constant byte address 0x4 - core index']
  #allocation1 [shape = 'u32[72,128]{1,0:T(1,128)}', space=vmem, size = 0x9000, scoped, tag = 'internal scratch']
  %s0 = inlined_call_operand.vmem [shape: f32[128,91], index: 0, kind: input, shape index: {}]
  %s1 = inlined_call_operand.vmem [shape: bf16[91,256], index: 1, kind: input, shape index: {}]
  %s2 = inlined_call_operand.vmem [shape: f32[1,256], index: 2, kind: input, shape index: {}]
  %s3 = inlined_call_operand.hbm [shape: bf16[256,384], index: 3, kind: input, shape index: {}]
  %s4 = inlined_call_operand.vmem [shape: f32[1,384], index: 4, kind: input, shape index: {}]
  %s5 = inlined_call_operand.hbm [shape: bf16[384,128], index: 5, kind: input, shape index: {}]
  %s6 = inlined_call_operand.vmem [shape: f32[1,128], index: 6, kind: input, shape index: {}]
  %s7 = inlined_call_operand.vmem [shape: bf16[128,128], index: 7, kind: output, shape index: {}]
  %s8 = sld [smem:[#allocation0]]
  $region46: #{net_forward.1} parent=0
    _
  %s10 = ssub.s32 1, %s8
  %s11 = scalar_select 0, %s10, %s8
  $region1: #{net_forward.1} parent=0
    #allocation2 [shape = 'u8[196608]{0}', space=vmem, size = 0x30000, scoped, tag = 'input window, operand 3, single buffered']
    #allocation3 [shape = 's32[1]{0}', space=sflag, size = 0x4, scoped, tag = 'scoped memory for net_forward.1']
    #allocation4 [shape = 'u8[98304]{0}', space=vmem, size = 0x18000, scoped, tag = 'input window, operand 5, single buffered']
    #allocation5 [shape = 's32[1]{0}', space=sflag, size = 0x4, scoped, tag = 'scoped memory for net_forward.1']
    %12 = vsyncpa [#allocation3], 0
    %13 = vsyncpa [#allocation5], 0
    // Predicated region
    $region2: #{net_forward.1} parent=1 // pred_check
      _
    $region3: #{net_forward.1} parent=1 // pred_check_branch
      %15 = sbr.rel (0) target = $region5
    $region4: #{net_forward.1} parent=1 // pred_region
      _
    $region5: #{net_forward.1} parent=1 // pred_fallthru
      _
    // Predicated region
    $region6: #{net_forward.1} parent=1 // pred_check
      _
    $region7: #{net_forward.1} parent=1 // pred_check_branch
      %17 = sbr.rel (0) target = $region9
    $region8: #{net_forward.1} parent=1 // pred_region
      _
    $region9: #{net_forward.1} parent=1 // pred_fallthru
      _
    // Predicated region
    $region10: #{net_forward.1} parent=1 // pred_check
      _
    $region11: #{net_forward.1} parent=1 // pred_check_branch
      %19 = sbr.rel (0) target = $region13
    $region12: #{net_forward.1} parent=1 // pred_region
      _
    $region13: #{net_forward.1} parent=1 // pred_fallthru
      _
    // Predicated region
    $region14: #{net_forward.1} parent=1 // pred_check
      _
    $region15: #{net_forward.1} parent=1 // pred_check_branch
      %21 = sbr.rel (0) target = $region17
    $region16: #{net_forward.1} parent=1 // pred_region
      %23 = vsyncadd [#allocation3], 0
      %s24 = sshll.u32 %s3, 4
      %s25 = int_to_ptr.hbm [resolvable:$true] %s24
      %s26 = sshll.u32 [#allocation2], 4
      %s27 = int_to_ptr.vmem [resolvable:$true] %s26
      %32 = dma.hbm_to_vmem [thread:$0]  %s25, 6144, %s27, [#allocation3], 192, 192, 12
    $region17: #{net_forward.1} parent=1 // pred_fallthru
      _
    // Predicated region
    $region18: #{net_forward.1} parent=1 // pred_check
      _
    $region19: #{net_forward.1} parent=1 // pred_check_branch
      %34 = sbr.rel (0) target = $region21
    $region20: #{net_forward.1} parent=1 // pred_region
      _
    $region21: #{net_forward.1} parent=1 // pred_fallthru
      _
    // Predicated region
    $region22: #{net_forward.1} parent=1 // pred_check
      _
    $region23: #{net_forward.1} parent=1 // pred_check_branch
      %36 = sbr.rel (0) target = $region25
    $region24: #{net_forward.1} parent=1 // pred_region
      %38 = vsyncadd [#allocation5], 0
      %s39 = sshll.u32 %s5, 4
      %s40 = int_to_ptr.hbm [resolvable:$true] %s39
      %s41 = sshll.u32 [#allocation4], 4
      %s42 = int_to_ptr.vmem [resolvable:$true] %s41
      %47 = dma.hbm_to_vmem [thread:$0]  %s40, 3072, %s42, [#allocation5], 64, 64, 4
    $region25: #{net_forward.1} parent=1 // pred_fallthru
      _
    // Predicated region
    $region26: #{net_forward.1} parent=1 // pred_check
      _
    $region27: #{net_forward.1} parent=1 // pred_check_branch
      %49 = sbr.rel (0) target = $region29
    $region28: #{net_forward.1} parent=1 // pred_region
      _
    $region29: #{net_forward.1} parent=1 // pred_fallthru
      _
    // Predicated region
    $region30: #{net_forward.1} parent=1 // pred_check
      _
    $region31: #{net_forward.1} parent=1 // pred_check_branch
      %51 = sbr.rel (0) target = $region33
    $region32: #{net_forward.1} parent=1 // pred_region
      %53 = dma.done [#allocation3], 6144
    $region33: #{net_forward.1} parent=1 // pred_fallthru
      _
    // Predicated region
    $region34: #{net_forward.1} parent=1 // pred_check
      _
    $region35: #{net_forward.1} parent=1 // pred_check_branch
      %55 = sbr.rel (0) target = $region37
    $region36: #{net_forward.1} parent=1 // pred_region
      %57 = dma.done [#allocation5], 3072
    $region37: #{net_forward.1} parent=1 // pred_fallthru
      _
    %v59 = vld [vmem:[%s0] sm:$0xff]
    %v60 = vld [vmem:[%s0 + $0x8] sm:$0xff]
    %v61 = vld [vmem:[%s0 + $0x10] sm:$0xff]
    %v62 = vld [vmem:[%s0 + $0x18] sm:$0xff]
    %v63 = vld [vmem:[%s0 + $0x20] sm:$0xff]
    %v64 = vld [vmem:[%s0 + $0x28] sm:$0xff]
    %v65 = vld [vmem:[%s0 + $0x30] sm:$0xff]
    %v66 = vld [vmem:[%s0 + $0x38] sm:$0xff]
    %v67 = vld [vmem:[%s0 + $0x40] sm:$0xff]
    %v68 = vld [vmem:[%s0 + $0x48] sm:$0xff]
    %v69 = vld [vmem:[%s0 + $0x50] sm:$0xff]
    %v70 = vld [vmem:[%s0 + $0x58] sm:$0xff]
    %v71 = vld [vmem:[%s0 + $0x60] sm:$0xff]
    %v72 = vld [vmem:[%s0 + $0x68] sm:$0xff]
    %v73 = vld [vmem:[%s0 + $0x70] sm:$0xff]
    %v74 = vld [vmem:[%s0 + $0x78] sm:$0xff]
    %v75 = vpack.c.bf16 %v60, %v59
    %v76 = vpack.c.bf16 %v62, %v61
    %v77 = vpack.c.bf16 %v64, %v63
    %v78 = vpack.c.bf16 %v66, %v65
    %v79 = vpack.c.bf16 %v68, %v67
    %v80 = vpack.c.bf16 %v70, %v69
    %v81 = vpack.c.bf16 %v72, %v71
    %v82 = vpack.c.bf16 %v74, %v73
    %v83 = vld [vmem:[%s1] sm:$0xff]
    %v84 = vld [vmem:[%s1 + $0x8] sm:$0xff]
    %v85 = vld [vmem:[%s1 + $0x10] sm:$0xff]
    %v86 = vld [vmem:[%s1 + $0x18] sm:$0xff]
    %v87 = vld [vmem:[%s1 + $0x20] sm:$0xff]
    %v88 = vld [vmem:[%s1 + $0x28] sm:$0xff]
    %v89 = vld [vmem:[%s1 + $0x30] sm:$0xff]
    %v90 = vld [vmem:[%s1 + $0x38] sm:$0xff]
    %v91 = vld [vmem:[%s1 + $0x40] sm:$0xff]
    %v92 = vld [vmem:[%s1 + $0x48] sm:$0xff]
    %v93 = vld [vmem:[%s1 + $0x50] sm:$0xff]
    %v94 = vld [vmem:[%s1 + $0x58] sm:$0x33]
    %v95 = vld [vmem:[%s2] sm:$0x3]
    %v97 = vperm.slane %v95, 0
    %v98 = vperm.slane %v95, 1
    %v113 = vunpack.c.l.b16 %v83
    %v114 = vunpack.c.h.b16 %v83
    %v115 = vunpack.c.l.b16 %v84
    %v116 = vunpack.c.h.b16 %v84
    %v117 = vunpack.c.l.b16 %v85
    %v118 = vunpack.c.h.b16 %v85
    %v119 = vunpack.c.l.b16 %v86
    %v120 = vunpack.c.h.b16 %v86
    %v121 = vunpack.c.l.b16 %v87
    %v122 = vunpack.c.h.b16 %v87
    %v123 = vunpack.c.l.b16 %v88
    %v124 = vunpack.c.h.b16 %v88
    %v125 = vunpack.c.l.b16 %v89
    %v126 = vunpack.c.h.b16 %v89
    %v127 = vunpack.c.l.b16 %v90
    %v128 = vunpack.c.h.b16 %v90
    %v129 = vunpack.c.l.b16 %v91
    %v130 = vunpack.c.h.b16 %v91
    %v131 = vunpack.c.l.b16 %v92
    %v132 = vunpack.c.h.b16 %v92
    %v133 = vunpack.c.l.b16 %v93
    %v134 = vunpack.c.h.b16 %v93
    %v135 = vunpack.c.l.b16 %v94
    %v136 = vunpack.c.h.b16 %v94
    %v137 = vpack.c.b16 %v115, %v113
    %v138 = vpack.c.b16 %v116, %v114
    %v139 = vpack.c.b16 %v119, %v117
    %v140 = vpack.c.b16 %v120, %v118
    %v141 = vpack.c.b16 %v123, %v121
    %v142 = vpack.c.b16 %v124, %v122
    %v143 = vpack.c.b16 %v127, %v125
    %v144 = vpack.c.b16 %v128, %v126
    %v145 = vpack.c.b16 %v131, %v129
    %v146 = vpack.c.b16 %v132, %v130
    %v147 = vpack.c.b16 %v135, %v133
    %v148 = vpack.c.b16 %v136, %v134
    %vm159 = vcmask 744448
    %v161 = vsel %vm159, %v75, 0
    %v164 = vsel %vm159, %v76, 0
    %v167 = vsel %vm159, %v77, 0
    %v170 = vsel %vm159, %v78, 0
    %v173 = vsel %vm159, %v79, 0
    %v176 = vsel %vm159, %v80, 0
    %v179 = vsel %vm159, %v81, 0
    %v182 = vsel %vm159, %v82, 0
    %vm184 = vcmask 1044480
    %vm185 = vcmask 1045504
    %v186 = vsel %vm184, 4294967295, 65535
    %v187 = vsel %vm185, %v186, 0
    %v189 = vand.u32 %v147, %v187
    %v192 = vand.u32 %v148, %v187
    %194 = vmatpush.bf16.msra.mxu0 0
    %195 = vmatpush.bf16.msra.mxu0 0
    %196 = vmatpush.bf16.msra.mxu0 %v189
    %197 = vmatpush.bf16.msra.mxu0 %v145
    %198 = vmatpush.bf16.msra.mxu0 %v143
    %199 = vmatpush.bf16.msra.mxu0 %v141
    %200 = vmatpush.bf16.msra.mxu0 %v139
    %201 = vmatpush.bf16.msra.mxu0 %v137
    %202 = vmatmul.bf16.gmra.mxu0 %v161
    %v203 = vpop.f32.mrf.mxu0
    %v204 = vadd.f32 %v97, %v203
    %v205 = vpop.f32.mrf.mxu0
    %v206 = vadd.f32 %v97, %v205
    %207 = vmatmul.bf16.gmra.mxu0 %v164
    %v208 = vpop.f32.mrf.mxu0
    %v209 = vadd.f32 %v97, %v208
    %v210 = vpop.f32.mrf.mxu0
    %v211 = vadd.f32 %v97, %v210
    %212 = vmatmul.bf16.gmra.mxu0 %v167
    %v213 = vpop.f32.mrf.mxu0
    %v214 = vadd.f32 %v97, %v213
    %v215 = vpop.f32.mrf.mxu0
    %v216 = vadd.f32 %v97, %v215
    %217 = vmatmul.bf16.gmra.mxu0 %v170
    %v218 = vpop.f32.mrf.mxu0
    %v219 = vadd.f32 %v97, %v218
    %v220 = vpop.f32.mrf.mxu0
    %v221 = vadd.f32 %v97, %v220
    %222 = vmatmul.bf16.gmra.mxu0 %v173
    %v223 = vpop.f32.mrf.mxu0
    %v224 = vadd.f32 %v97, %v223
    %v225 = vpop.f32.mrf.mxu0
    %v226 = vadd.f32 %v97, %v225
    %227 = vmatmul.bf16.gmra.mxu0 %v176
    %v228 = vpop.f32.mrf.mxu0
    %v229 = vadd.f32 %v97, %v228
    %v230 = vpop.f32.mrf.mxu0
    %v231 = vadd.f32 %v97, %v230
    %232 = vmatmul.bf16.gmra.mxu0 %v179
    %v233 = vpop.f32.mrf.mxu0
    %v234 = vadd.f32 %v97, %v233
    %v235 = vpop.f32.mrf.mxu0
    %v236 = vadd.f32 %v97, %v235
    %237 = vmatmul.bf16.gmra.mxu0 %v182
    %v238 = vpop.f32.mrf.mxu0
    %v239 = vadd.f32 %v97, %v238
    %v240 = vpop.f32.mrf.mxu0
    %v241 = vadd.f32 %v97, %v240
    %242 = vdwg.mxu0
    %243 = vmatpush.bf16.msra.mxu0 0
    %244 = vmatpush.bf16.msra.mxu0 0
    %245 = vmatpush.bf16.msra.mxu0 %v192
    %246 = vmatpush.bf16.msra.mxu0 %v146
    %247 = vmatpush.bf16.msra.mxu0 %v144
    %248 = vmatpush.bf16.msra.mxu0 %v142
    %249 = vmatpush.bf16.msra.mxu0 %v140
    %250 = vmatpush.bf16.msra.mxu0 %v138
    %251 = vmatmul.bf16.gmra.mxu0 %v161
    %v252 = vpop.f32.mrf.mxu0
    %v253 = vadd.f32 %v98, %v252
    %v254 = vpop.f32.mrf.mxu0
    %v255 = vadd.f32 %v98, %v254
    %256 = vmatmul.bf16.gmra.mxu0 %v164
    %v257 = vpop.f32.mrf.mxu0
    %v258 = vadd.f32 %v98, %v257
    %v259 = vpop.f32.mrf.mxu0
    %v260 = vadd.f32 %v98, %v259
    %261 = vmatmul.bf16.gmra.mxu0 %v167
    %v262 = vpop.f32.mrf.mxu0
    %v263 = vadd.f32 %v98, %v262
    %v264 = vpop.f32.mrf.mxu0
    %v265 = vadd.f32 %v98, %v264
    %266 = vmatmul.bf16.gmra.mxu0 %v170
    %v267 = vpop.f32.mrf.mxu0
    %v268 = vadd.f32 %v98, %v267
    %v269 = vpop.f32.mrf.mxu0
    %v270 = vadd.f32 %v98, %v269
    %271 = vmatmul.bf16.gmra.mxu0 %v173
    %v272 = vpop.f32.mrf.mxu0
    %v273 = vadd.f32 %v98, %v272
    %v274 = vpop.f32.mrf.mxu0
    %v275 = vadd.f32 %v98, %v274
    %276 = vmatmul.bf16.gmra.mxu0 %v176
    %v277 = vpop.f32.mrf.mxu0
    %v278 = vadd.f32 %v98, %v277
    %v279 = vpop.f32.mrf.mxu0
    %v280 = vadd.f32 %v98, %v279
    %281 = vmatmul.bf16.gmra.mxu0 %v179
    %v282 = vpop.f32.mrf.mxu0
    %v283 = vadd.f32 %v98, %v282
    %v284 = vpop.f32.mrf.mxu0
    %v285 = vadd.f32 %v98, %v284
    %286 = vmatmul.bf16.gmra.mxu0 %v182
    %v287 = vpop.f32.mrf.mxu0
    %v288 = vadd.f32 %v98, %v287
    %v289 = vpop.f32.mrf.mxu0
    %v290 = vadd.f32 %v98, %v289
    %291 = vdwg.mxu0
    %v292 = vmax.f32 %v204, 0.0
    %v293 = vmax.f32 %v253, 0.0
    %v294 = vmax.f32 %v206, 0.0
    %v295 = vmax.f32 %v255, 0.0
    %v296 = vmax.f32 %v209, 0.0
    %v297 = vmax.f32 %v258, 0.0
    %v298 = vmax.f32 %v211, 0.0
    %v299 = vmax.f32 %v260, 0.0
    %v300 = vmax.f32 %v214, 0.0
    %v301 = vmax.f32 %v263, 0.0
    %v302 = vmax.f32 %v216, 0.0
    %v303 = vmax.f32 %v265, 0.0
    %v304 = vmax.f32 %v219, 0.0
    %v305 = vmax.f32 %v268, 0.0
    %v306 = vmax.f32 %v221, 0.0
    %v307 = vmax.f32 %v270, 0.0
    %v308 = vmax.f32 %v224, 0.0
    %v309 = vmax.f32 %v273, 0.0
    %v310 = vmax.f32 %v226, 0.0
    %v311 = vmax.f32 %v275, 0.0
    %v312 = vmax.f32 %v229, 0.0
    %v313 = vmax.f32 %v278, 0.0
    %v314 = vmax.f32 %v231, 0.0
    %v315 = vmax.f32 %v280, 0.0
    %v316 = vmax.f32 %v234, 0.0
    %v317 = vmax.f32 %v283, 0.0
    %v318 = vmax.f32 %v236, 0.0
    %v319 = vmax.f32 %v285, 0.0
    %v320 = vmax.f32 %v239, 0.0
    %v321 = vmax.f32 %v288, 0.0
    %v322 = vmax.f32 %v241, 0.0
    %v323 = vmax.f32 %v290, 0.0
    %v324 = vpack.c.bf16 %v294, %v292
    %v325 = vpack.c.bf16 %v295, %v293
    %v326 = vpack.c.bf16 %v298, %v296
    %v327 = vpack.c.bf16 %v299, %v297
    %v328 = vpack.c.bf16 %v302, %v300
    %v329 = vpack.c.bf16 %v303, %v301
    %v330 = vpack.c.bf16 %v306, %v304
    %v331 = vpack.c.bf16 %v307, %v305
    %v332 = vpack.c.bf16 %v310, %v308
    %v333 = vpack.c.bf16 %v311, %v309
    %v334 = vpack.c.bf16 %v314, %v312
    %v335 = vpack.c.bf16 %v315, %v313
    %v336 = vpack.c.bf16 %v318, %v316
    %v337 = vpack.c.bf16 %v319, %v317
    %v338 = vpack.c.bf16 %v322, %v320
    %v339 = vpack.c.bf16 %v323, %v321
    %v340 = vld [vmem:[#allocation2] sm:$0xff]
    %v341 = vld [vmem:[#allocation2 + $0x8] sm:$0xf]
    %v342 = vld [vmem:[#allocation2 + $0xc] sm:$0xff]
    %v343 = vld [vmem:[#allocation2 + $0x14] sm:$0xf]
    %v344 = vld [vmem:[#allocation2 + $0x18] sm:$0xff]
    %v345 = vld [vmem:[#allocation2 + $0x20] sm:$0xf]
    %v346 = vld [vmem:[#allocation2 + $0x24] sm:$0xff]
    %v347 = vld [vmem:[#allocation2 + $0x2c] sm:$0xf]
    %v348 = vld [vmem:[#allocation2 + $0x30] sm:$0xff]
    %v349 = vld [vmem:[#allocation2 + $0x38] sm:$0xf]
    %v350 = vld [vmem:[#allocation2 + $0x3c] sm:$0xff]
    %v351 = vld [vmem:[#allocation2 + $0x44] sm:$0xf]
    %v352 = vld [vmem:[#allocation2 + $0x48] sm:$0xff]
    %v353 = vld [vmem:[#allocation2 + $0x50] sm:$0xf]
    %v354 = vld [vmem:[#allocation2 + $0x54] sm:$0xff]
    %v355 = vld [vmem:[#allocation2 + $0x5c] sm:$0xf]
    %v356 = vld [vmem:[#allocation2 + $0x60] sm:$0xff]
    %v357 = vld [vmem:[#allocation2 + $0x68] sm:$0xf]
    %v358 = vld [vmem:[#allocation2 + $0x6c] sm:$0xff]
    %v359 = vld [vmem:[#allocation2 + $0x74] sm:$0xf]
    %v360 = vld [vmem:[#allocation2 + $0x78] sm:$0xff]
    %v361 = vld [vmem:[#allocation2 + $0x80] sm:$0xf]
    %v362 = vld [vmem:[#allocation2 + $0x84] sm:$0xff]
    %v363 = vld [vmem:[#allocation2 + $0x8c] sm:$0xf]
    %v364 = vld [vmem:[#allocation2 + $0x90] sm:$0xff]
    %v365 = vld [vmem:[#allocation2 + $0x98] sm:$0xf]
    %v366 = vld [vmem:[#allocation2 + $0x9c] sm:$0xff]
    %v367 = vld [vmem:[#allocation2 + $0xa4] sm:$0xf]
    %v368 = vld [vmem:[#allocation2 + $0xa8] sm:$0xff]
    %v369 = vld [vmem:[#allocation2 + $0xb0] sm:$0xf]
    %v370 = vld [vmem:[#allocation2 + $0xb4] sm:$0xff]
    %v371 = vld [vmem:[#allocation2 + $0xbc] sm:$0xf]
    %v372 = vld [vmem:[#allocation2 + $0xc0] sm:$0xff]
    %v373 = vld [vmem:[#allocation2 + $0xc8] sm:$0xf]
    %v374 = vld [vmem:[#allocation2 + $0xcc] sm:$0xff]
    %v375 = vld [vmem:[#allocation2 + $0xd4] sm:$0xf]
    %v376 = vld [vmem:[#allocation2 + $0xd8] sm:$0xff]
    %v377 = vld [vmem:[#allocation2 + $0xe0] sm:$0xf]
    %v378 = vld [vmem:[#allocation2 + $0xe4] sm:$0xff]
    %v379 = vld [vmem:[#allocation2 + $0xec] sm:$0xf]
    %v380 = vld [vmem:[#allocation2 + $0xf0] sm:$0xff]
    %v381 = vld [vmem:[#allocation2 + $0xf8] sm:$0xf]
    %v382 = vld [vmem:[#allocation2 + $0xfc] sm:$0xff]
    %v383 = vld [vmem:[#allocation2 + $0x104] sm:$0xf]
    %v384 = vld [vmem:[#allocation2 + $0x108] sm:$0xff]
    %v385 = vld [vmem:[#allocation2 + $0x110] sm:$0xf]
    %v386 = vld [vmem:[#allocation2 + $0x114] sm:$0xff]
    %v387 = vld [vmem:[#allocation2 + $0x11c] sm:$0xf]
    %v388 = vld [vmem:[#allocation2 + $0x120] sm:$0xff]
    %v389 = vld [vmem:[#allocation2 + $0x128] sm:$0xf]
    %v390 = vld [vmem:[#allocation2 + $0x12c] sm:$0xff]
    %v391 = vld [vmem:[#allocation2 + $0x134] sm:$0xf]
    %v392 = vld [vmem:[#allocation2 + $0x138] sm:$0xff]
    %v393 = vld [vmem:[#allocation2 + $0x140] sm:$0xf]
    %v394 = vld [vmem:[#allocation2 + $0x144] sm:$0xff]
    %v395 = vld [vmem:[#allocation2 + $0x14c] sm:$0xf]
    %v396 = vld [vmem:[#allocation2 + $0x150] sm:$0xff]
    %v397 = vld [vmem:[#allocation2 + $0x158] sm:$0xf]
    %v398 = vld [vmem:[#allocation2 + $0x15c] sm:$0xff]
    %v399 = vld [vmem:[#allocation2 + $0x164] sm:$0xf]
    %v400 = vld [vmem:[#allocation2 + $0x168] sm:$0xff]
    %v401 = vld [vmem:[#allocation2 + $0x170] sm:$0xf]
    %v402 = vld [vmem:[#allocation2 + $0x174] sm:$0xff]
    %v403 = vld [vmem:[#allocation2 + $0x17c] sm:$0xf]
    %v404 = vld [vmem:[%s4] sm:$0x7]
    %v406 = vperm.slane %v404, 0
    %v407 = vperm.slane %v404, 1
    %v408 = vperm.slane %v404, 2
    %v476 = vunpack.c.l.b16 %v340
    %v477 = vunpack.c.h.b16 %v340
    %v478 = vunpack.c.l.b16 %v341
    %v479 = vunpack.c.l.b16 %v342
    %v480 = vunpack.c.h.b16 %v342
    %v481 = vunpack.c.l.b16 %v343
    %v482 = vunpack.c.l.b16 %v344
    %v483 = vunpack.c.h.b16 %v344
    %v484 = vunpack.c.l.b16 %v345
    %v485 = vunpack.c.l.b16 %v346
    %v486 = vunpack.c.h.b16 %v346
    %v487 = vunpack.c.l.b16 %v347
    %v488 = vunpack.c.l.b16 %v348
    %v489 = vunpack.c.h.b16 %v348
    %v490 = vunpack.c.l.b16 %v349
    %v491 = vunpack.c.l.b16 %v350
    %v492 = vunpack.c.h.b16 %v350
    %v493 = vunpack.c.l.b16 %v351
    %v494 = vunpack.c.l.b16 %v352
    %v495 = vunpack.c.h.b16 %v352
    %v496 = vunpack.c.l.b16 %v353
    %v497 = vunpack.c.l.b16 %v354
    %v498 = vunpack.c.h.b16 %v354
    %v499 = vunpack.c.l.b16 %v355
    %v500 = vunpack.c.l.b16 %v356
    %v501 = vunpack.c.h.b16 %v356
    %v502 = vunpack.c.l.b16 %v357
    %v503 = vunpack.c.l.b16 %v358
    %v504 = vunpack.c.h.b16 %v358
    %v505 = vunpack.c.l.b16 %v359
    %v506 = vunpack.c.l.b16 %v360
    %v507 = vunpack.c.h.b16 %v360
    %v508 = vunpack.c.l.b16 %v361
    %v509 = vunpack.c.l.b16 %v362
    %v510 = vunpack.c.h.b16 %v362
    %v511 = vunpack.c.l.b16 %v363
    %v512 = vunpack.c.l.b16 %v364
    %v513 = vunpack.c.h.b16 %v364
    %v514 = vunpack.c.l.b16 %v365
    %v515 = vunpack.c.l.b16 %v366
    %v516 = vunpack.c.h.b16 %v366
    %v517 = vunpack.c.l.b16 %v367
    %v518 = vunpack.c.l.b16 %v368
    %v519 = vunpack.c.h.b16 %v368
    %v520 = vunpack.c.l.b16 %v369
    %v521 = vunpack.c.l.b16 %v370
    %v522 = vunpack.c.h.b16 %v370
    %v523 = vunpack.c.l.b16 %v371
    %v524 = vunpack.c.l.b16 %v372
    %v525 = vunpack.c.h.b16 %v372
    %v526 = vunpack.c.l.b16 %v373
    %v527 = vunpack.c.l.b16 %v374
    %v528 = vunpack.c.h.b16 %v374
    %v529 = vunpack.c.l.b16 %v375
    %v530 = vunpack.c.l.b16 %v376
    %v531 = vunpack.c.h.b16 %v376
    %v532 = vunpack.c.l.b16 %v377
    %v533 = vunpack.c.l.b16 %v378
    %v534 = vunpack.c.h.b16 %v378
    %v535 = vunpack.c.l.b16 %v379
    %v536 = vunpack.c.l.b16 %v380
    %v537 = vunpack.c.h.b16 %v380
    %v538 = vunpack.c.l.b16 %v381
    %v539 = vunpack.c.l.b16 %v382
    %v540 = vunpack.c.h.b16 %v382
    %v541 = vunpack.c.l.b16 %v383
    %v542 = vunpack.c.l.b16 %v384
    %v543 = vunpack.c.h.b16 %v384
    %v544 = vunpack.c.l.b16 %v385
    %v545 = vunpack.c.l.b16 %v386
    %v546 = vunpack.c.h.b16 %v386
    %v547 = vunpack.c.l.b16 %v387
    %v548 = vunpack.c.l.b16 %v388
    %v549 = vunpack.c.h.b16 %v388
    %v550 = vunpack.c.l.b16 %v389
    %v551 = vunpack.c.l.b16 %v390
    %v552 = vunpack.c.h.b16 %v390
    %v553 = vunpack.c.l.b16 %v391
    %v554 = vunpack.c.l.b16 %v392
    %v555 = vunpack.c.h.b16 %v392
    %v556 = vunpack.c.l.b16 %v393
    %v557 = vunpack.c.l.b16 %v394
    %v558 = vunpack.c.h.b16 %v394
    %v559 = vunpack.c.l.b16 %v395
    %v560 = vunpack.c.l.b16 %v396
    %v561 = vunpack.c.h.b16 %v396
    %v562 = vunpack.c.l.b16 %v397
    %v563 = vunpack.c.l.b16 %v398
    %v564 = vunpack.c.h.b16 %v398
    %v565 = vunpack.c.l.b16 %v399
    %v566 = vunpack.c.l.b16 %v400
    %v567 = vunpack.c.h.b16 %v400
    %v568 = vunpack.c.l.b16 %v401
    %v569 = vunpack.c.l.b16 %v402
    %v570 = vunpack.c.h.b16 %v402
    %v571 = vunpack.c.l.b16 %v403
    %v572 = vpack.c.b16 %v479, %v476
    %v573 = vpack.c.b16 %v480, %v477
    %v574 = vpack.c.b16 %v481, %v478
    %v575 = vpack.c.b16 %v485, %v482
    %v576 = vpack.c.b16 %v486, %v483
    %v577 = vpack.c.b16 %v487, %v484
    %v578 = vpack.c.b16 %v491, %v488
    %v579 = vpack.c.b16 %v492, %v489
    %v580 = vpack.c.b16 %v493, %v490
    %v581 = vpack.c.b16 %v497, %v494
    %v582 = vpack.c.b16 %v498, %v495
    %v583 = vpack.c.b16 %v499, %v496
    %v584 = vpack.c.b16 %v503, %v500
    %v585 = vpack.c.b16 %v504, %v501
    %v586 = vpack.c.b16 %v505, %v502
    %v587 = vpack.c.b16 %v509, %v506
    %v588 = vpack.c.b16 %v510, %v507
    %v589 = vpack.c.b16 %v511, %v508
    %v590 = vpack.c.b16 %v515, %v512
    %v591 = vpack.c.b16 %v516, %v513
    %v592 = vpack.c.b16 %v517, %v514
    %v593 = vpack.c.b16 %v521, %v518
    %v594 = vpack.c.b16 %v522, %v519
    %v595 = vpack.c.b16 %v523, %v520
    %v596 = vpack.c.b16 %v527, %v524
    %v597 = vpack.c.b16 %v528, %v525
    %v598 = vpack.c.b16 %v529, %v526
    %v599 = vpack.c.b16 %v533, %v530
    %v600 = vpack.c.b16 %v534, %v531
    %v601 = vpack.c.b16 %v535, %v532
    %v602 = vpack.c.b16 %v539, %v536
    %v603 = vpack.c.b16 %v540, %v537
    %v604 = vpack.c.b16 %v541, %v538
    %v605 = vpack.c.b16 %v545, %v542
    %v606 = vpack.c.b16 %v546, %v543
    %v607 = vpack.c.b16 %v547, %v544
    %v608 = vpack.c.b16 %v551, %v548
    %v609 = vpack.c.b16 %v552, %v549
    %v610 = vpack.c.b16 %v553, %v550
    %v611 = vpack.c.b16 %v557, %v554
    %v612 = vpack.c.b16 %v558, %v555
    %v613 = vpack.c.b16 %v559, %v556
    %v614 = vpack.c.b16 %v563, %v560
    %v615 = vpack.c.b16 %v564, %v561
    %v616 = vpack.c.b16 %v565, %v562
    %v617 = vpack.c.b16 %v569, %v566
    %v618 = vpack.c.b16 %v570, %v567
    %v619 = vpack.c.b16 %v571, %v568
    %668 = vmatpush.bf16.msra.mxu0 %v593
    %669 = vmatpush.bf16.msra.mxu0 %v590
    %670 = vmatpush.bf16.msra.mxu0 %v587
    %671 = vmatpush.bf16.msra.mxu0 %v584
    %672 = vmatpush.bf16.msra.mxu0 %v581
    %673 = vmatpush.bf16.msra.mxu0 %v578
    %674 = vmatpush.bf16.msra.mxu0 %v575
    %675 = vmatpush.bf16.msra.mxu0 %v572
    %676 = vmatmul.bf16.gmra.mxu0 %v324
    %v677 = vpop.f32.mrf.mxu0
    %v678 = vadd.f32 %v406, %v677
    %v679 = vpop.f32.mrf.mxu0
    %v680 = vadd.f32 %v406, %v679
    %681 = vmatmul.bf16.gmra.mxu0 %v326
    %v682 = vpop.f32.mrf.mxu0
    %v683 = vadd.f32 %v406, %v682
    %v684 = vpop.f32.mrf.mxu0
    %v685 = vadd.f32 %v406, %v684
    %686 = vmatmul.bf16.gmra.mxu0 %v328
    %v687 = vpop.f32.mrf.mxu0
    %v688 = vadd.f32 %v406, %v687
    %v689 = vpop.f32.mrf.mxu0
    %v690 = vadd.f32 %v406, %v689
    %691 = vmatmul.bf16.gmra.mxu0 %v330
    %v692 = vpop.f32.mrf.mxu0
    %v693 = vadd.f32 %v406, %v692
    %v694 = vpop.f32.mrf.mxu0
    %v695 = vadd.f32 %v406, %v694
    %696 = vmatmul.bf16.gmra.mxu0 %v332
    %v697 = vpop.f32.mrf.mxu0
    %v698 = vadd.f32 %v406, %v697
    %v699 = vpop.f32.mrf.mxu0
    %v700 = vadd.f32 %v406, %v699
    %701 = vmatmul.bf16.gmra.mxu0 %v334
    %v702 = vpop.f32.mrf.mxu0
    %v703 = vadd.f32 %v406, %v702
    %v704 = vpop.f32.mrf.mxu0
    %v705 = vadd.f32 %v406, %v704
    %706 = vmatmul.bf16.gmra.mxu0 %v336
    %v707 = vpop.f32.mrf.mxu0
    %v708 = vadd.f32 %v406, %v707
    %v709 = vpop.f32.mrf.mxu0
    %v710 = vadd.f32 %v406, %v709
    %711 = vmatmul.bf16.gmra.mxu0 %v338
    %v712 = vpop.f32.mrf.mxu0
    %v713 = vadd.f32 %v406, %v712
    %v714 = vpop.f32.mrf.mxu0
    %v715 = vadd.f32 %v406, %v714
    %716 = vdwg.mxu0
    %717 = vmatpush.bf16.msra.mxu0 %v617
    %718 = vmatpush.bf16.msra.mxu0 %v614
    %719 = vmatpush.bf16.msra.mxu0 %v611
    %720 = vmatpush.bf16.msra.mxu0 %v608
    %721 = vmatpush.bf16.msra.mxu0 %v605
    %722 = vmatpush.bf16.msra.mxu0 %v602
    %723 = vmatpush.bf16.msra.mxu0 %v599
    %724 = vmatpush.bf16.msra.mxu0 %v596
    %725 = vmatmul.bf16.gmra.mxu0 %v325
    %v726 = vpop.f32.mrf.mxu0
    %v727 = vadd.f32 %v678, %v726
    %v728 = vpop.f32.mrf.mxu0
    %v729 = vadd.f32 %v680, %v728
    %730 = vmatmul.bf16.gmra.mxu0 %v327
    %v731 = vpop.f32.mrf.mxu0
    %v732 = vadd.f32 %v683, %v731
    %v733 = vpop.f32.mrf.mxu0
    %v734 = vadd.f32 %v685, %v733
    %735 = vmatmul.bf16.gmra.mxu0 %v329
    %v736 = vpop.f32.mrf.mxu0
    %v737 = vadd.f32 %v688, %v736
    %v738 = vpop.f32.mrf.mxu0
    %v739 = vadd.f32 %v690, %v738
    %740 = vmatmul.bf16.gmra.mxu0 %v331
    %v741 = vpop.f32.mrf.mxu0
    %v742 = vadd.f32 %v693, %v741
    %v743 = vpop.f32.mrf.mxu0
    %v744 = vadd.f32 %v695, %v743
    %745 = vmatmul.bf16.gmra.mxu0 %v333
    %v746 = vpop.f32.mrf.mxu0
    %v747 = vadd.f32 %v698, %v746
    %v748 = vpop.f32.mrf.mxu0
    %v749 = vadd.f32 %v700, %v748
    %750 = vmatmul.bf16.gmra.mxu0 %v335
    %v751 = vpop.f32.mrf.mxu0
    %v752 = vadd.f32 %v703, %v751
    %v753 = vpop.f32.mrf.mxu0
    %v754 = vadd.f32 %v705, %v753
    %755 = vmatmul.bf16.gmra.mxu0 %v337
    %v756 = vpop.f32.mrf.mxu0
    %v757 = vadd.f32 %v708, %v756
    %v758 = vpop.f32.mrf.mxu0
    %v759 = vadd.f32 %v710, %v758
    %760 = vmatmul.bf16.gmra.mxu0 %v339
    %v761 = vpop.f32.mrf.mxu0
    %v762 = vadd.f32 %v713, %v761
    %v763 = vpop.f32.mrf.mxu0
    %v764 = vadd.f32 %v715, %v763
    %765 = vdwg.mxu0
    %766 = vmatpush.bf16.msra.mxu0 %v594
    %767 = vmatpush.bf16.msra.mxu0 %v591
    %768 = vmatpush.bf16.msra.mxu0 %v588
    %769 = vmatpush.bf16.msra.mxu0 %v585
    %770 = vmatpush.bf16.msra.mxu0 %v582
    %771 = vmatpush.bf16.msra.mxu0 %v579
    %772 = vmatpush.bf16.msra.mxu0 %v576
    %773 = vmatpush.bf16.msra.mxu0 %v573
    %774 = vmatmul.bf16.gmra.mxu0 %v324
    %v775 = vpop.f32.mrf.mxu0
    %v776 = vadd.f32 %v407, %v775
    %v777 = vpop.f32.mrf.mxu0
    %v778 = vadd.f32 %v407, %v777
    %779 = vmatmul.bf16.gmra.mxu0 %v326
    %v780 = vpop.f32.mrf.mxu0
    %v781 = vadd.f32 %v407, %v780
    %v782 = vpop.f32.mrf.mxu0
    %v783 = vadd.f32 %v407, %v782
    %784 = vmatmul.bf16.gmra.mxu0 %v328
    %v785 = vpop.f32.mrf.mxu0
    %v786 = vadd.f32 %v407, %v785
    %v787 = vpop.f32.mrf.mxu0
    %v788 = vadd.f32 %v407, %v787
    %789 = vmatmul.bf16.gmra.mxu0 %v330
    %v790 = vpop.f32.mrf.mxu0
    %v791 = vadd.f32 %v407, %v790
    %v792 = vpop.f32.mrf.mxu0
    %v793 = vadd.f32 %v407, %v792
    %794 = vmatmul.bf16.gmra.mxu0 %v332
    %v795 = vpop.f32.mrf.mxu0
    %v796 = vadd.f32 %v407, %v795
    %v797 = vpop.f32.mrf.mxu0
    %v798 = vadd.f32 %v407, %v797
    %799 = vmatmul.bf16.gmra.mxu0 %v334
    %v800 = vpop.f32.mrf.mxu0
    %v801 = vadd.f32 %v407, %v800
    %v802 = vpop.f32.mrf.mxu0
    %v803 = vadd.f32 %v407, %v802
    %804 = vmatmul.bf16.gmra.mxu0 %v336
    %v805 = vpop.f32.mrf.mxu0
    %v806 = vadd.f32 %v407, %v805
    %v807 = vpop.f32.mrf.mxu0
    %v808 = vadd.f32 %v407, %v807
    %809 = vmatmul.bf16.gmra.mxu0 %v338
    %v810 = vpop.f32.mrf.mxu0
    %v811 = vadd.f32 %v407, %v810
    %v812 = vpop.f32.mrf.mxu0
    %v813 = vadd.f32 %v407, %v812
    %814 = vdwg.mxu0
    %815 = vmatpush.bf16.msra.mxu0 %v618
    %816 = vmatpush.bf16.msra.mxu0 %v615
    %817 = vmatpush.bf16.msra.mxu0 %v612
    %818 = vmatpush.bf16.msra.mxu0 %v609
    %819 = vmatpush.bf16.msra.mxu0 %v606
    %820 = vmatpush.bf16.msra.mxu0 %v603
    %821 = vmatpush.bf16.msra.mxu0 %v600
    %822 = vmatpush.bf16.msra.mxu0 %v597
    %823 = vmatmul.bf16.gmra.mxu0 %v325
    %v824 = vpop.f32.mrf.mxu0
    %v825 = vadd.f32 %v776, %v824
    %v826 = vpop.f32.mrf.mxu0
    %v827 = vadd.f32 %v778, %v826
    %828 = vmatmul.bf16.gmra.mxu0 %v327
    %v829 = vpop.f32.mrf.mxu0
    %v830 = vadd.f32 %v781, %v829
    %v831 = vpop.f32.mrf.mxu0
    %v832 = vadd.f32 %v783, %v831
    %833 = vmatmul.bf16.gmra.mxu0 %v329
    %v834 = vpop.f32.mrf.mxu0
    %v835 = vadd.f32 %v786, %v834
    %v836 = vpop.f32.mrf.mxu0
    %v837 = vadd.f32 %v788, %v836
    %838 = vmatmul.bf16.gmra.mxu0 %v331
    %v839 = vpop.f32.mrf.mxu0
    %v840 = vadd.f32 %v791, %v839
    %v841 = vpop.f32.mrf.mxu0
    %v842 = vadd.f32 %v793, %v841
    %843 = vmatmul.bf16.gmra.mxu0 %v333
    %v844 = vpop.f32.mrf.mxu0
    %v845 = vadd.f32 %v796, %v844
    %v846 = vpop.f32.mrf.mxu0
    %v847 = vadd.f32 %v798, %v846
    %848 = vmatmul.bf16.gmra.mxu0 %v335
    %v849 = vpop.f32.mrf.mxu0
    %v850 = vadd.f32 %v801, %v849
    %v851 = vpop.f32.mrf.mxu0
    %v852 = vadd.f32 %v803, %v851
    %853 = vmatmul.bf16.gmra.mxu0 %v337
    %v854 = vpop.f32.mrf.mxu0
    %v855 = vadd.f32 %v806, %v854
    %v856 = vpop.f32.mrf.mxu0
    %v857 = vadd.f32 %v808, %v856
    %858 = vmatmul.bf16.gmra.mxu0 %v339
    %v859 = vpop.f32.mrf.mxu0
    %v860 = vadd.f32 %v811, %v859
    %v861 = vpop.f32.mrf.mxu0
    %v862 = vadd.f32 %v813, %v861
    %863 = vdwg.mxu0
    %864 = vmatpush.bf16.msra.mxu0 %v595
    %865 = vmatpush.bf16.msra.mxu0 %v592
    %866 = vmatpush.bf16.msra.mxu0 %v589
    %867 = vmatpush.bf16.msra.mxu0 %v586
    %868 = vmatpush.bf16.msra.mxu0 %v583
    %869 = vmatpush.bf16.msra.mxu0 %v580
    %870 = vmatpush.bf16.msra.mxu0 %v577
    %871 = vmatpush.bf16.msra.mxu0 %v574
    %872 = vmatmul.bf16.gmra.mxu0 %v324
    %v873 = vpop.f32.mrf.mxu0
    %v874 = vadd.f32 %v408, %v873
    %v875 = vpop.f32.mrf.mxu0
    %v876 = vadd.f32 %v408, %v875
    %877 = vmatmul.bf16.gmra.mxu0 %v326
    %v878 = vpop.f32.mrf.mxu0
    %v879 = vadd.f32 %v408, %v878
    %v880 = vpop.f32.mrf.mxu0
    %v881 = vadd.f32 %v408, %v880
    %882 = vmatmul.bf16.gmra.mxu0 %v328
    %v883 = vpop.f32.mrf.mxu0
    %v884 = vadd.f32 %v408, %v883
    %v885 = vpop.f32.mrf.mxu0
    %v886 = vadd.f32 %v408, %v885
    %887 = vmatmul.bf16.gmra.mxu0 %v330
    %v888 = vpop.f32.mrf.mxu0
    %v889 = vadd.f32 %v408, %v888
    %v890 = vpop.f32.mrf.mxu0
    %v891 = vadd.f32 %v408, %v890
    %892 = vmatmul.bf16.gmra.mxu0 %v332
    %v893 = vpop.f32.mrf.mxu0
    %v894 = vadd.f32 %v408, %v893
    %v895 = vpop.f32.mrf.mxu0
    %v896 = vadd.f32 %v408, %v895
    %897 = vmatmul.bf16.gmra.mxu0 %v334
    %v898 = vpop.f32.mrf.mxu0
    %v899 = vadd.f32 %v408, %v898
    %v900 = vpop.f32.mrf.mxu0
    %v901 = vadd.f32 %v408, %v900
    %902 = vmatmul.bf16.gmra.mxu0 %v336
    %v903 = vpop.f32.mrf.mxu0
    %v904 = vadd.f32 %v408, %v903
    %v905 = vpop.f32.mrf.mxu0
    %v906 = vadd.f32 %v408, %v905
    %907 = vmatmul.bf16.gmra.mxu0 %v338
    %v908 = vpop.f32.mrf.mxu0
    %v909 = vadd.f32 %v408, %v908
    %v910 = vpop.f32.mrf.mxu0
    %v911 = vadd.f32 %v408, %v910
    %912 = vdwg.mxu0
    %913 = vmatpush.bf16.msra.mxu0 %v619
    %914 = vmatpush.bf16.msra.mxu0 %v616
    %915 = vmatpush.bf16.msra.mxu0 %v613
    %916 = vmatpush.bf16.msra.mxu0 %v610
    %917 = vmatpush.bf16.msra.mxu0 %v607
    %918 = vmatpush.bf16.msra.mxu0 %v604
    %919 = vmatpush.bf16.msra.mxu0 %v601
    %920 = vmatpush.bf16.msra.mxu0 %v598
    %921 = vmatmul.bf16.gmra.mxu0 %v325
    %v922 = vpop.f32.mrf.mxu0
    %v923 = vadd.f32 %v874, %v922
    %v924 = vpop.f32.mrf.mxu0
    %v925 = vadd.f32 %v876, %v924
    %926 = vmatmul.bf16.gmra.mxu0 %v327
    %v927 = vpop.f32.mrf.mxu0
    %v928 = vadd.f32 %v879, %v927
    %v929 = vpop.f32.mrf.mxu0
    %v930 = vadd.f32 %v881, %v929
    %931 = vmatmul.bf16.gmra.mxu0 %v329
    %v932 = vpop.f32.mrf.mxu0
    %v933 = vadd.f32 %v884, %v932
    %v934 = vpop.f32.mrf.mxu0
    %v935 = vadd.f32 %v886, %v934
    %936 = vmatmul.bf16.gmra.mxu0 %v331
    %v937 = vpop.f32.mrf.mxu0
    %v938 = vadd.f32 %v889, %v937
    %v939 = vpop.f32.mrf.mxu0
    %v940 = vadd.f32 %v891, %v939
    %941 = vmatmul.bf16.gmra.mxu0 %v333
    %v942 = vpop.f32.mrf.mxu0
    %v943 = vadd.f32 %v894, %v942
    %v944 = vpop.f32.mrf.mxu0
    %v945 = vadd.f32 %v896, %v944
    %946 = vmatmul.bf16.gmra.mxu0 %v335
    %v947 = vpop.f32.mrf.mxu0
    %v948 = vadd.f32 %v899, %v947
    %v949 = vpop.f32.mrf.mxu0
    %v950 = vadd.f32 %v901, %v949
    %951 = vmatmul.bf16.gmra.mxu0 %v337
    %v952 = vpop.f32.mrf.mxu0
    %v953 = vadd.f32 %v904, %v952
    %v954 = vpop.f32.mrf.mxu0
    %v955 = vadd.f32 %v906, %v954
    %956 = vmatmul.bf16.gmra.mxu0 %v339
    %v957 = vpop.f32.mrf.mxu0
    %v958 = vadd.f32 %v909, %v957
    %v959 = vpop.f32.mrf.mxu0
    %v960 = vadd.f32 %v911, %v959
    %961 = vdwg.mxu0
    %v962 = vmax.f32 %v727, 0.0
    %v963 = vmax.f32 %v825, 0.0
    %v964 = vmax.f32 %v923, 0.0
    %v965 = vmax.f32 %v729, 0.0
    %v966 = vmax.f32 %v827, 0.0
    %v967 = vmax.f32 %v925, 0.0
    %v968 = vmax.f32 %v732, 0.0
    %v969 = vmax.f32 %v830, 0.0
    %v970 = vmax.f32 %v928, 0.0
    %v971 = vmax.f32 %v734, 0.0
    %v972 = vmax.f32 %v832, 0.0
    %v973 = vmax.f32 %v930, 0.0
    %v974 = vmax.f32 %v737, 0.0
    %v975 = vmax.f32 %v835, 0.0
    %v976 = vmax.f32 %v933, 0.0
    %v977 = vmax.f32 %v739, 0.0
    %v978 = vmax.f32 %v837, 0.0
    %v979 = vmax.f32 %v935, 0.0
    %v980 = vmax.f32 %v742, 0.0
    %v981 = vmax.f32 %v840, 0.0
    %v982 = vmax.f32 %v938, 0.0
    %v983 = vmax.f32 %v744, 0.0
    %v984 = vmax.f32 %v842, 0.0
    %v985 = vmax.f32 %v940, 0.0
    %v986 = vmax.f32 %v747, 0.0
    %v987 = vmax.f32 %v845, 0.0
    %v988 = vmax.f32 %v943, 0.0
    %v989 = vmax.f32 %v749, 0.0
    %v990 = vmax.f32 %v847, 0.0
    %v991 = vmax.f32 %v945, 0.0
    %v992 = vmax.f32 %v752, 0.0
    %v993 = vmax.f32 %v850, 0.0
    %v994 = vmax.f32 %v948, 0.0
    %v995 = vmax.f32 %v754, 0.0
    %v996 = vmax.f32 %v852, 0.0
    %v997 = vmax.f32 %v950, 0.0
    %v998 = vmax.f32 %v757, 0.0
    %v999 = vmax.f32 %v855, 0.0
    %v1000 = vmax.f32 %v953, 0.0
    %v1001 = vmax.f32 %v759, 0.0
    %v1002 = vmax.f32 %v857, 0.0
    %v1003 = vmax.f32 %v955, 0.0
    %v1004 = vmax.f32 %v762, 0.0
    %v1005 = vmax.f32 %v860, 0.0
    %v1006 = vmax.f32 %v958, 0.0
    %v1007 = vmax.f32 %v764, 0.0
    %v1008 = vmax.f32 %v862, 0.0
    %v1009 = vmax.f32 %v960, 0.0
    %v1010 = vpack.c.bf16 %v965, %v962
    %v1011 = vpack.c.bf16 %v966, %v963
    %v1012 = vpack.c.bf16 %v967, %v964
    %v1013 = vpack.c.bf16 %v971, %v968
    %v1014 = vpack.c.bf16 %v972, %v969
    %v1015 = vpack.c.bf16 %v973, %v970
    %v1016 = vpack.c.bf16 %v977, %v974
    %v1017 = vpack.c.bf16 %v978, %v975
    %v1018 = vpack.c.bf16 %v979, %v976
    %v1019 = vpack.c.bf16 %v983, %v980
    %v1020 = vpack.c.bf16 %v984, %v981
    %v1021 = vpack.c.bf16 %v985, %v982
    %v1022 = vpack.c.bf16 %v989, %v986
    %v1023 = vpack.c.bf16 %v990, %v987
    %v1024 = vpack.c.bf16 %v991, %v988
    %v1025 = vpack.c.bf16 %v995, %v992
    %v1026 = vpack.c.bf16 %v996, %v993
    %v1027 = vpack.c.bf16 %v997, %v994
    %v1028 = vpack.c.bf16 %v1001, %v998
    %v1029 = vpack.c.bf16 %v1002, %v999
    %v1030 = vpack.c.bf16 %v1003, %v1000
    %v1031 = vpack.c.bf16 %v1007, %v1004
    %v1032 = vpack.c.bf16 %v1008, %v1005
    %v1033 = vpack.c.bf16 %v1009, %v1006
    %v1034 = vld [vmem:[#allocation4] sm:$0xf]
    %v1035 = vld [vmem:[#allocation4 + $0x4] sm:$0xf]
    %v1036 = vld [vmem:[#allocation4 + $0x8] sm:$0xf]
    %v1037 = vld [vmem:[#allocation4 + $0xc] sm:$0xf]
    %v1038 = vld [vmem:[#allocation4 + $0x10] sm:$0xf]
    %v1039 = vld [vmem:[#allocation4 + $0x14] sm:$0xf]
    %v1040 = vld [vmem:[#allocation4 + $0x18] sm:$0xf]
    %v1041 = vld [vmem:[#allocation4 + $0x1c] sm:$0xf]
    %v1042 = vld [vmem:[#allocation4 + $0x20] sm:$0xf]
    %v1043 = vld [vmem:[#allocation4 + $0x24] sm:$0xf]
    %v1044 = vld [vmem:[#allocation4 + $0x28] sm:$0xf]
    %v1045 = vld [vmem:[#allocation4 + $0x2c] sm:$0xf]
    %v1046 = vld [vmem:[#allocation4 + $0x30] sm:$0xf]
    %v1047 = vld [vmem:[#allocation4 + $0x34] sm:$0xf]
    %v1048 = vld [vmem:[#allocation4 + $0x38] sm:$0xf]
    %v1049 = vld [vmem:[#allocation4 + $0x3c] sm:$0xf]
    %v1050 = vld [vmem:[#allocation4 + $0x40] sm:$0xf]
    %v1051 = vld [vmem:[#allocation4 + $0x44] sm:$0xf]
    %v1052 = vld [vmem:[#allocation4 + $0x48] sm:$0xf]
    %v1053 = vld [vmem:[#allocation4 + $0x4c] sm:$0xf]
    %v1054 = vld [vmem:[#allocation4 + $0x50] sm:$0xf]
    %v1055 = vld [vmem:[#allocation4 + $0x54] sm:$0xf]
    %v1056 = vld [vmem:[#allocation4 + $0x58] sm:$0xf]
    %v1057 = vld [vmem:[#allocation4 + $0x5c] sm:$0xf]
    %v1058 = vld [vmem:[#allocation4 + $0x60] sm:$0xf]
    %v1059 = vld [vmem:[#allocation4 + $0x64] sm:$0xf]
    %v1060 = vld [vmem:[#allocation4 + $0x68] sm:$0xf]
    %v1061 = vld [vmem:[#allocation4 + $0x6c] sm:$0xf]
    %v1062 = vld [vmem:[#allocation4 + $0x70] sm:$0xf]
    %v1063 = vld [vmem:[#allocation4 + $0x74] sm:$0xf]
    %v1064 = vld [vmem:[#allocation4 + $0x78] sm:$0xf]
    %v1065 = vld [vmem:[#allocation4 + $0x7c] sm:$0xf]
    %v1066 = vld [vmem:[#allocation4 + $0x80] sm:$0xf]
    %v1067 = vld [vmem:[#allocation4 + $0x84] sm:$0xf]
    %v1068 = vld [vmem:[#allocation4 + $0x88] sm:$0xf]
    %v1069 = vld [vmem:[#allocation4 + $0x8c] sm:$0xf]
    %v1070 = vld [vmem:[#allocation4 + $0x90] sm:$0xf]
    %v1071 = vld [vmem:[#allocation4 + $0x94] sm:$0xf]
    %v1072 = vld [vmem:[#allocation4 + $0x98] sm:$0xf]
    %v1073 = vld [vmem:[#allocation4 + $0x9c] sm:$0xf]
    %v1074 = vld [vmem:[#allocation4 + $0xa0] sm:$0xf]
    %v1075 = vld [vmem:[#allocation4 + $0xa4] sm:$0xf]
    %v1076 = vld [vmem:[#allocation4 + $0xa8] sm:$0xf]
    %v1077 = vld [vmem:[#allocation4 + $0xac] sm:$0xf]
    %v1078 = vld [vmem:[#allocation4 + $0xb0] sm:$0xf]
    %v1079 = vld [vmem:[#allocation4 + $0xb4] sm:$0xf]
    %v1080 = vld [vmem:[#allocation4 + $0xb8] sm:$0xf]
    %v1081 = vld [vmem:[#allocation4 + $0xbc] sm:$0xf]
    %v1082 = vld [vmem:[%s6] sm:$0x1]
    %v1084 = vperm.slane %v1082, 0
    %v1134 = vunpack.c.l.b16 %v1034
    %v1135 = vunpack.c.l.b16 %v1035
    %v1136 = vunpack.c.l.b16 %v1036
    %v1137 = vunpack.c.l.b16 %v1037
    %v1138 = vunpack.c.l.b16 %v1038
    %v1139 = vunpack.c.l.b16 %v1039
    %v1140 = vunpack.c.l.b16 %v1040
    %v1141 = vunpack.c.l.b16 %v1041
    %v1142 = vunpack.c.l.b16 %v1042
    %v1143 = vunpack.c.l.b16 %v1043
    %v1144 = vunpack.c.l.b16 %v1044
    %v1145 = vunpack.c.l.b16 %v1045
    %v1146 = vunpack.c.l.b16 %v1046
    %v1147 = vunpack.c.l.b16 %v1047
    %v1148 = vunpack.c.l.b16 %v1048
    %v1149 = vunpack.c.l.b16 %v1049
    %v1150 = vunpack.c.l.b16 %v1050
    %v1151 = vunpack.c.l.b16 %v1051
    %v1152 = vunpack.c.l.b16 %v1052
    %v1153 = vunpack.c.l.b16 %v1053
    %v1154 = vunpack.c.l.b16 %v1054
    %v1155 = vunpack.c.l.b16 %v1055
    %v1156 = vunpack.c.l.b16 %v1056
    %v1157 = vunpack.c.l.b16 %v1057
    %v1158 = vunpack.c.l.b16 %v1058
    %v1159 = vunpack.c.l.b16 %v1059
    %v1160 = vunpack.c.l.b16 %v1060
    %v1161 = vunpack.c.l.b16 %v1061
    %v1162 = vunpack.c.l.b16 %v1062
    %v1163 = vunpack.c.l.b16 %v1063
    %v1164 = vunpack.c.l.b16 %v1064
    %v1165 = vunpack.c.l.b16 %v1065
    %v1166 = vunpack.c.l.b16 %v1066
    %v1167 = vunpack.c.l.b16 %v1067
    %v1168 = vunpack.c.l.b16 %v1068
    %v1169 = vunpack.c.l.b16 %v1069
    %v1170 = vunpack.c.l.b16 %v1070
    %v1171 = vunpack.c.l.b16 %v1071
    %v1172 = vunpack.c.l.b16 %v1072
    %v1173 = vunpack.c.l.b16 %v1073
    %v1174 = vunpack.c.l.b16 %v1074
    %v1175 = vunpack.c.l.b16 %v1075
    %v1176 = vunpack.c.l.b16 %v1076
    %v1177 = vunpack.c.l.b16 %v1077
    %v1178 = vunpack.c.l.b16 %v1078
    %v1179 = vunpack.c.l.b16 %v1079
    %v1180 = vunpack.c.l.b16 %v1080
    %v1181 = vunpack.c.l.b16 %v1081
    %v1182 = vpack.c.b16 %v1135, %v1134
    %v1183 = vpack.c.b16 %v1137, %v1136
    %v1184 = vpack.c.b16 %v1139, %v1138
    %v1185 = vpack.c.b16 %v1141, %v1140
    %v1186 = vpack.c.b16 %v1143, %v1142
    %v1187 = vpack.c.b16 %v1145, %v1144
    %v1188 = vpack.c.b16 %v1147, %v1146
    %v1189 = vpack.c.b16 %v1149, %v1148
    %v1190 = vpack.c.b16 %v1151, %v1150
    %v1191 = vpack.c.b16 %v1153, %v1152
    %v1192 = vpack.c.b16 %v1155, %v1154
    %v1193 = vpack.c.b16 %v1157, %v1156
    %v1194 = vpack.c.b16 %v1159, %v1158
    %v1195 = vpack.c.b16 %v1161, %v1160
    %v1196 = vpack.c.b16 %v1163, %v1162
    %v1197 = vpack.c.b16 %v1165, %v1164
    %v1198 = vpack.c.b16 %v1167, %v1166
    %v1199 = vpack.c.b16 %v1169, %v1168
    %v1200 = vpack.c.b16 %v1171, %v1170
    %v1201 = vpack.c.b16 %v1173, %v1172
    %v1202 = vpack.c.b16 %v1175, %v1174
    %v1203 = vpack.c.b16 %v1177, %v1176
    %v1204 = vpack.c.b16 %v1179, %v1178
    %v1205 = vpack.c.b16 %v1181, %v1180
    %1230 = vmatpush.bf16.msra.mxu0 %v1189
    %1231 = vmatpush.bf16.msra.mxu0 %v1188
    %1232 = vmatpush.bf16.msra.mxu0 %v1187
    %1233 = vmatpush.bf16.msra.mxu0 %v1186
    %1234 = vmatpush.bf16.msra.mxu0 %v1185
    %1235 = vmatpush.bf16.msra.mxu0 %v1184
    %1236 = vmatpush.bf16.msra.mxu0 %v1183
    %1237 = vmatpush.bf16.msra.mxu0 %v1182
    %1238 = vmatmul.bf16.gmra.mxu0 %v1010
    %v1239 = vpop.f32.mrf.mxu0
    %v1240 = vadd.f32 %v1084, %v1239
    %v1241 = vpop.f32.mrf.mxu0
    %v1242 = vadd.f32 %v1084, %v1241
    %1243 = vmatmul.bf16.gmra.mxu0 %v1013
    %v1244 = vpop.f32.mrf.mxu0
    %v1245 = vadd.f32 %v1084, %v1244
    %v1246 = vpop.f32.mrf.mxu0
    %v1247 = vadd.f32 %v1084, %v1246
    %1248 = vmatmul.bf16.gmra.mxu0 %v1016
    %v1249 = vpop.f32.mrf.mxu0
    %v1250 = vadd.f32 %v1084, %v1249
    %v1251 = vpop.f32.mrf.mxu0
    %v1252 = vadd.f32 %v1084, %v1251
    %1253 = vmatmul.bf16.gmra.mxu0 %v1019
    %v1254 = vpop.f32.mrf.mxu0
    %v1255 = vadd.f32 %v1084, %v1254
    %v1256 = vpop.f32.mrf.mxu0
    %v1257 = vadd.f32 %v1084, %v1256
    %1258 = vmatmul.bf16.gmra.mxu0 %v1022
    %v1259 = vpop.f32.mrf.mxu0
    %v1260 = vadd.f32 %v1084, %v1259
    %v1261 = vpop.f32.mrf.mxu0
    %v1262 = vadd.f32 %v1084, %v1261
    %1263 = vmatmul.bf16.gmra.mxu0 %v1025
    %v1264 = vpop.f32.mrf.mxu0
    %v1265 = vadd.f32 %v1084, %v1264
    %v1266 = vpop.f32.mrf.mxu0
    %v1267 = vadd.f32 %v1084, %v1266
    %1268 = vmatmul.bf16.gmra.mxu0 %v1028
    %v1269 = vpop.f32.mrf.mxu0
    %v1270 = vadd.f32 %v1084, %v1269
    %v1271 = vpop.f32.mrf.mxu0
    %v1272 = vadd.f32 %v1084, %v1271
    %1273 = vmatmul.bf16.gmra.mxu0 %v1031
    %v1274 = vpop.f32.mrf.mxu0
    %v1275 = vadd.f32 %v1084, %v1274
    %v1276 = vpop.f32.mrf.mxu0
    %v1277 = vadd.f32 %v1084, %v1276
    %1278 = vdwg.mxu0
    %1279 = vmatpush.bf16.msra.mxu0 %v1197
    %1280 = vmatpush.bf16.msra.mxu0 %v1196
    %1281 = vmatpush.bf16.msra.mxu0 %v1195
    %1282 = vmatpush.bf16.msra.mxu0 %v1194
    %1283 = vmatpush.bf16.msra.mxu0 %v1193
    %1284 = vmatpush.bf16.msra.mxu0 %v1192
    %1285 = vmatpush.bf16.msra.mxu0 %v1191
    %1286 = vmatpush.bf16.msra.mxu0 %v1190
    %1287 = vmatmul.bf16.gmra.mxu0 %v1011
    %v1288 = vpop.f32.mrf.mxu0
    %v1289 = vadd.f32 %v1240, %v1288
    %v1290 = vpop.f32.mrf.mxu0
    %v1291 = vadd.f32 %v1242, %v1290
    %1292 = vmatmul.bf16.gmra.mxu0 %v1014
    %v1293 = vpop.f32.mrf.mxu0
    %v1294 = vadd.f32 %v1245, %v1293
    %v1295 = vpop.f32.mrf.mxu0
    %v1296 = vadd.f32 %v1247, %v1295
    %1297 = vmatmul.bf16.gmra.mxu0 %v1017
    %v1298 = vpop.f32.mrf.mxu0
    %v1299 = vadd.f32 %v1250, %v1298
    %v1300 = vpop.f32.mrf.mxu0
    %v1301 = vadd.f32 %v1252, %v1300
    %1302 = vmatmul.bf16.gmra.mxu0 %v1020
    %v1303 = vpop.f32.mrf.mxu0
    %v1304 = vadd.f32 %v1255, %v1303
    %v1305 = vpop.f32.mrf.mxu0
    %v1306 = vadd.f32 %v1257, %v1305
    %1307 = vmatmul.bf16.gmra.mxu0 %v1023
    %v1308 = vpop.f32.mrf.mxu0
    %v1309 = vadd.f32 %v1260, %v1308
    %v1310 = vpop.f32.mrf.mxu0
    %v1311 = vadd.f32 %v1262, %v1310
    %1312 = vmatmul.bf16.gmra.mxu0 %v1026
    %v1313 = vpop.f32.mrf.mxu0
    %v1314 = vadd.f32 %v1265, %v1313
    %v1315 = vpop.f32.mrf.mxu0
    %v1316 = vadd.f32 %v1267, %v1315
    %1317 = vmatmul.bf16.gmra.mxu0 %v1029
    %v1318 = vpop.f32.mrf.mxu0
    %v1319 = vadd.f32 %v1270, %v1318
    %v1320 = vpop.f32.mrf.mxu0
    %v1321 = vadd.f32 %v1272, %v1320
    %1322 = vmatmul.bf16.gmra.mxu0 %v1032
    %v1323 = vpop.f32.mrf.mxu0
    %v1324 = vadd.f32 %v1275, %v1323
    %v1325 = vpop.f32.mrf.mxu0
    %v1326 = vadd.f32 %v1277, %v1325
    %1327 = vdwg.mxu0
    %1328 = vmatpush.bf16.msra.mxu0 %v1205
    %1329 = vmatpush.bf16.msra.mxu0 %v1204
    %1330 = vmatpush.bf16.msra.mxu0 %v1203
    %1331 = vmatpush.bf16.msra.mxu0 %v1202
    %1332 = vmatpush.bf16.msra.mxu0 %v1201
    %1333 = vmatpush.bf16.msra.mxu0 %v1200
    %1334 = vmatpush.bf16.msra.mxu0 %v1199
    %1335 = vmatpush.bf16.msra.mxu0 %v1198
    %1336 = vmatmul.bf16.gmra.mxu0 %v1012
    %v1337 = vpop.f32.mrf.mxu0
    %v1338 = vadd.f32 %v1289, %v1337
    %v1339 = vpop.f32.mrf.mxu0
    %v1340 = vadd.f32 %v1291, %v1339
    %1341 = vmatmul.bf16.gmra.mxu0 %v1015
    %v1342 = vpop.f32.mrf.mxu0
    %v1343 = vadd.f32 %v1294, %v1342
    %v1344 = vpop.f32.mrf.mxu0
    %v1345 = vadd.f32 %v1296, %v1344
    %1346 = vmatmul.bf16.gmra.mxu0 %v1018
    %v1347 = vpop.f32.mrf.mxu0
    %v1348 = vadd.f32 %v1299, %v1347
    %v1349 = vpop.f32.mrf.mxu0
    %v1350 = vadd.f32 %v1301, %v1349
    %1351 = vmatmul.bf16.gmra.mxu0 %v1021
    %v1352 = vpop.f32.mrf.mxu0
    %v1353 = vadd.f32 %v1304, %v1352
    %v1354 = vpop.f32.mrf.mxu0
    %v1355 = vadd.f32 %v1306, %v1354
    %1356 = vmatmul.bf16.gmra.mxu0 %v1024
    %v1357 = vpop.f32.mrf.mxu0
    %v1358 = vadd.f32 %v1309, %v1357
    %v1359 = vpop.f32.mrf.mxu0
    %v1360 = vadd.f32 %v1311, %v1359
    %1361 = vmatmul.bf16.gmra.mxu0 %v1027
    %v1362 = vpop.f32.mrf.mxu0
    %v1363 = vadd.f32 %v1314, %v1362
    %v1364 = vpop.f32.mrf.mxu0
    %v1365 = vadd.f32 %v1316, %v1364
    %1366 = vmatmul.bf16.gmra.mxu0 %v1030
    %v1367 = vpop.f32.mrf.mxu0
    %v1368 = vadd.f32 %v1319, %v1367
    %v1369 = vpop.f32.mrf.mxu0
    %v1370 = vadd.f32 %v1321, %v1369
    %1371 = vmatmul.bf16.gmra.mxu0 %v1033
    %v1372 = vpop.f32.mrf.mxu0
    %v1373 = vadd.f32 %v1324, %v1372
    %v1374 = vpop.f32.mrf.mxu0
    %v1375 = vadd.f32 %v1326, %v1374
    %1376 = vdwg.mxu0
    %v1377 = vpack.c.bf16 %v1338, %v1338
    %v1378 = vpack.c.bf16 %v1340, %v1340
    %v1379 = vpack.c.bf16 %v1343, %v1343
    %v1380 = vpack.c.bf16 %v1345, %v1345
    %v1381 = vpack.c.bf16 %v1348, %v1348
    %v1382 = vpack.c.bf16 %v1350, %v1350
    %v1383 = vpack.c.bf16 %v1353, %v1353
    %v1384 = vpack.c.bf16 %v1355, %v1355
    %v1385 = vpack.c.bf16 %v1358, %v1358
    %v1386 = vpack.c.bf16 %v1360, %v1360
    %v1387 = vpack.c.bf16 %v1363, %v1363
    %v1388 = vpack.c.bf16 %v1365, %v1365
    %v1389 = vpack.c.bf16 %v1368, %v1368
    %v1390 = vpack.c.bf16 %v1370, %v1370
    %v1391 = vpack.c.bf16 %v1373, %v1373
    %v1392 = vpack.c.bf16 %v1375, %v1375
    %1393 = vst [vmem:[%s7] sm:$0xf] %v1377
    %1394 = vst [vmem:[%s7 + $0x4] sm:$0xf] %v1378
    %1395 = vst [vmem:[%s7 + $0x8] sm:$0xf] %v1379
    %1396 = vst [vmem:[%s7 + $0xc] sm:$0xf] %v1380
    %1397 = vst [vmem:[%s7 + $0x10] sm:$0xf] %v1381
    %1398 = vst [vmem:[%s7 + $0x14] sm:$0xf] %v1382
    %1399 = vst [vmem:[%s7 + $0x18] sm:$0xf] %v1383
    %1400 = vst [vmem:[%s7 + $0x1c] sm:$0xf] %v1384
    %1401 = vst [vmem:[%s7 + $0x20] sm:$0xf] %v1385
    %1402 = vst [vmem:[%s7 + $0x24] sm:$0xf] %v1386
    %1403 = vst [vmem:[%s7 + $0x28] sm:$0xf] %v1387
    %1404 = vst [vmem:[%s7 + $0x2c] sm:$0xf] %v1388
    %1405 = vst [vmem:[%s7 + $0x30] sm:$0xf] %v1389
    %1406 = vst [vmem:[%s7 + $0x34] sm:$0xf] %v1390
    %1407 = vst [vmem:[%s7 + $0x38] sm:$0xf] %v1391
    %1408 = vst [vmem:[%s7 + $0x3c] sm:$0xf] %v1392
    // Predicated region
    $region38: #{net_forward.1} parent=1 // pred_check
      _
    $region39: #{net_forward.1} parent=1 // pred_check_branch
      %1410 = sbr.rel (0) target = $region41
    $region40: #{net_forward.1} parent=1 // pred_region
      _
    $region41: #{net_forward.1} parent=1 // pred_fallthru
      _
    // Predicated region
    $region42: #{net_forward.1} parent=1 // pred_check
      _
    $region43: #{net_forward.1} parent=1 // pred_check_branch
      %1412 = sbr.rel (0) target = $region45
    $region44: #{net_forward.1} parent=1 // pred_region
      _
    $region45: #{net_forward.1} parent=1 // pred_fallthru
      _
    %1413 = vsyncpa [#allocation3], 1
    %1414 = vsyncpa [#allocation5], 1

</llo_original>
